<compile_context>
chip_gen: v7x
topology: tpu7x:2x2x1
jax: 0.10.0
libtpu: 0.0.40
codegen_flags: <defaults>
</compile_context>

<pallas_src>
import functools

import jax
import jax.numpy as jnp
from jax.experimental import pallas as pl
from jax.experimental.pallas import tpu as pltpu


LANE = 128
EXPANSION = 4


def _round_up(x, m):
    return ((x + m - 1) // m) * m


def _pad_axis(a, axis, target):
    pad = target - a.shape[axis]
    if pad == 0:
        return a
    widths = [(0, 0)] * a.ndim
    widths[axis] = (0, pad)
    return jnp.pad(a, widths)


def _largest_divisor_leq(n, cap):
    cap = max(1, min(n, cap))
    for d in range(cap, 0, -1):
        if n % d == 0:
            return d
    return 1


def _pick_tm(m, cap=512):
    """Largest multiple-of-8 M tile that divides m (avoids wrapper M padding)."""
    best = 0
    t = 8
    while t <= min(cap, m):
        if m % t == 0:
            best = t
        t += 8
    if best:
        return best, m
    if m <= cap:                       # small ragged M: one full block (legal)
        return m, m
    return 256, _round_up(m, 256)      # rare fallback: pad the ragged tail


def _vmem_limit(block_bytes):
    # Footprint-derived ask (double-buffered blocks + slack), capped well below
    # v7x's 64 MiB physical VMEM.
    return int(min(max(block_bytes + (2 << 20), 16 << 20), 48 << 20))


# ----------------------------- Pallas kernels ------------------------------ #

def _mm_bias_kernel(x_ref, w_ref, b_ref, o_ref, *, relu):
    # bf16 (tm, K) @ (K, N) on the MXU, f32 accumulation; BN scale is already
    # folded into w, so the epilogue is just +bias (+ ReLU).
    acc = jnp.dot(x_ref[...], w_ref[...], preferred_element_type=jnp.float32)
    y = acc + b_ref[...]
    if relu:
        y = jnp.maximum(y, 0.0)
    o_ref[...] = y.astype(o_ref.dtype)


def _mm_bias_res_relu_kernel(x_ref, w_ref, b_ref, sc_ref, o_ref):
    # conv3 + identity shortcut (bf16 residual) + final ReLU.
    acc = jnp.dot(x_ref[...], w_ref[...], preferred_element_type=jnp.float32)
    y = acc + b_ref[...] + sc_ref[...].astype(jnp.float32)
    o_ref[...] = jnp.maximum(y, 0.0).astype(o_ref.dtype)


def _mm_bias_dsres_relu_kernel(x_ref, w_ref, b_ref, xs_ref, ws_ref, bs_ref, o_ref):
    # conv3 with the downsample-shortcut 1x1 conv fused as a second MXU matmul
    # into the same f32 accumulator, then the final ReLU.
    acc = jnp.dot(x_ref[...], w_ref[...], preferred_element_type=jnp.float32)
    acc = acc + b_ref[...]
    acc = acc + jnp.dot(xs_ref[...], ws_ref[...], preferred_element_type=jnp.float32)
    acc = acc + bs_ref[...]
    o_ref[...] = jnp.maximum(acc, 0.0).astype(o_ref.dtype)


def _conv3x3_kernel(x_ref, w_ref, b_ref, o_ref, *, stride, th, wout, cin):
    # x_ref: (1, Hq, Wq, stride*stride*cin) space-to-depth, spatially padded
    #        conv1 output for one image (resident across the row-tile axis).
    # w_ref: (9, cin, cout) tap-major weights (ky*3+kx), BN scale folded.
    # o_ref: (1, th, wout, cout) output row tile.
    h0 = pl.program_id(1) * th
    cout = o_ref.shape[-1]
    acc = jnp.zeros((th * wout, cout), jnp.float32)
    for ky in range(3):
        dy, sy = divmod(ky, stride)
        for kx in range(3):
            dx, sx = divmod(kx, stride)
            coff = (sy * stride + sx) * cin
            xt = x_ref[:, pl.ds(h0 + dy, th), pl.ds(dx, wout), pl.ds(coff, cin)]
            acc += jnp.dot(xt.reshape(th * wout, cin), w_ref[ky * 3 + kx],
                           preferred_element_type=jnp.float32)
    y = jnp.maximum(acc + b_ref[...], 0.0)
    o_ref[...] = y.reshape(1, th, wout, cout).astype(o_ref.dtype)


# ------------------------------ Pallas wrappers ----------------------------- #

def fused_matmul(x2d, w, bias, *, relu=True, residual=None, residual_mm=None,
                 out_dtype=jnp.bfloat16):
    """maybe_relu(x2d @ w + bias [+ residual | + xs @ ws + bs]).

    x2d         (M, K)  bf16 activations.
    w           (K, N)  bf16 weights (BN scale folded); N multiple of 128.
    bias        (1, N)  f32 folded BN bias.
    residual    (M, N)  optional bf16 residual (identity shortcut).
    residual_mm (xs, ws, bs): fused downsample-shortcut matmul.
    Weights / biases are VMEM-resident (index map constant across the grid).
    """
    m, k = x2d.shape
    kw, n = w.shape
    assert k == kw and n % LANE == 0
    tm, m_pad = _pick_tm(m)

    def pad_m(a):
        return a if a.shape[0] == m_pad else _pad_axis(a, 0, m_pad)

    x2d = pad_m(x2d)
    grid = (m_pad // tm,)

    in_specs = [
        pl.BlockSpec((tm, k), lambda i: (i, 0)),
        pl.BlockSpec((k, n), lambda i: (0, 0)),      # resident weights
        pl.BlockSpec((1, n), lambda i: (0, 0)),      # resident bias
    ]
    args = [x2d, w, bias]
    flops = 2 * m_pad * k * n
    bytes_acc = x2d.size * 2 + w.size * 2 + bias.size * 4
    blk = tm * k * 2 + k * n * 2 + n * 4

    if residual_mm is not None:
        xs, ws, bs = residual_mm
        ks = ws.shape[0]
        xs = pad_m(xs)
        in_specs += [
            pl.BlockSpec((tm, ks), lambda i: (i, 0)),
            pl.BlockSpec((ks, n), lambda i: (0, 0)),  # resident shortcut weights
            pl.BlockSpec((1, n), lambda i: (0, 0)),
        ]
        args += [xs, ws, bs]
        flops += 2 * m_pad * ks * n
        bytes_acc += xs.size * 2 + ws.size * 2 + bs.size * 4
        blk += tm * ks * 2 + ks * n * 2 + n * 4
        kernel = _mm_bias_dsres_relu_kernel
    elif residual is not None:
        sc = pad_m(residual)
        in_specs.append(pl.BlockSpec((tm, n), lambda i: (i, 0)))
        args.append(sc)
        bytes_acc += sc.size * sc.dtype.itemsize
        blk += tm * n * sc.dtype.itemsize
        kernel = _mm_bias_res_relu_kernel
    else:
        kernel = functools.partial(_mm_bias_kernel, relu=relu)

    out_itemsize = jnp.dtype(out_dtype).itemsize
    bytes_acc += m_pad * n * out_itemsize
    blk += tm * n * out_itemsize

    out = pl.pallas_call(
        kernel,
        out_shape=jax.ShapeDtypeStruct((m_pad, n), out_dtype),
        grid_spec=pl.GridSpec(
            grid=grid,
            in_specs=in_specs,
            out_specs=pl.BlockSpec((tm, n), lambda i: (i, 0)),
        ),
        compiler_params=pltpu.CompilerParams(
            dimension_semantics=("parallel",),
            vmem_limit_bytes=_vmem_limit(2 * blk),
        ),
        cost_estimate=pl.CostEstimate(
            flops=int(flops), transcendentals=0, bytes_accessed=int(bytes_acc)),
    )(*args)
    return out[:m] if m_pad != m else out


def conv3x3_bn_relu(y, w9, bias, stride):
    """3x3 / pad=1 / stride conv + folded BN + ReLU with no HBM im2col.

    The 9 taps are reduced inside one kernel invocation from a resident,
    spatially padded, space-to-depth copy of the input, so every tap slice in
    the kernel is a contiguous (lane-aligned) window for any stride.
    """
    n, h, w, c = y.shape
    s = stride
    hout = (h - 1) // s + 1
    wout = (w - 1) // s + 1
    hq = -(-(h + 2) // s)
    wq = -(-(w + 2) // s)
    # pad=1 spatial halo (+ round H/W up to a multiple of s; extra rows/cols
    # are never read), then fold the s x s sub-pixel grid into channels.
    yp = jnp.pad(y, ((0, 0), (1, hq * s - h - 1), (1, wq * s - w - 1), (0, 0)))
    yq = yp.reshape(n, hq, s, wq, s, c)
    yq = yq.transpose(0, 1, 3, 2, 4, 5).reshape(n, hq, wq, s * s * c)

    cout = w9.shape[-1]
    th = _largest_divisor_leq(hout, max(1, 512 // max(wout, 1)))
    grid = (n, hout // th)

    blk = (hq * wq * s * s * c * 2 + 9 * c * cout * 2 + cout * 4
           + th * wout * cout * 2)

    out = pl.pallas_call(
        functools.partial(_conv3x3_kernel, stride=s, th=th, wout=wout, cin=c),
        out_shape=jax.ShapeDtypeStruct((n, hout, wout, cout), jnp.bfloat16),
        grid_spec=pl.GridSpec(
            grid=grid,
            in_specs=[
                pl.BlockSpec((1, hq, wq, s * s * c), lambda b, i: (b, 0, 0, 0)),
                pl.BlockSpec((9, c, cout), lambda b, i: (0, 0, 0)),   # resident
                pl.BlockSpec((1, cout), lambda b, i: (0, 0)),         # resident
            ],
            out_specs=pl.BlockSpec((1, th, wout, cout), lambda b, i: (b, i, 0, 0)),
        ),
        compiler_params=pltpu.CompilerParams(
            dimension_semantics=("parallel", "parallel"),
            vmem_limit_bytes=_vmem_limit(2 * blk),
        ),
        cost_estimate=pl.CostEstimate(
            flops=int(18 * n * hout * wout * c * cout),
            transcendentals=0,
            bytes_accessed=int(yq.size * 2 + w9.size * 2 + bias.size * 4
                               + n * hout * wout * cout * 2)),
    )(yq, w9, bias)
    return out, (hout, wout)


# ------------------------------ JAX glue ----------------------------------- #

def init_params(key, in_channels, out_channels, stride):
    """PyTorch-layout parameters (OIHW conv weights, eval-mode BN stats)."""
    cexp = out_channels * EXPANSION
    keys = jax.random.split(key, 8)

    def bn_params(k, c):
        k1, k2, k3, k4 = jax.random.split(k, 4)
        gamma = 1.0 + 0.1 * jax.random.normal(k1, (c,), jnp.float32)
        beta = 0.1 * jax.random.normal(k2, (c,), jnp.float32)
        mean = 0.1 * jax.random.normal(k3, (c,), jnp.float32)
        var = jax.random.uniform(k4, (c,), jnp.float32, 0.5, 1.5)
        return (gamma, beta, mean, var)

    params = {
        "w1_oihw": 0.1 * jax.random.normal(
            keys[0], (out_channels, in_channels, 1, 1), jnp.float32),
        "bn1": bn_params(keys[1], out_channels),
        "w2_oihw": 0.1 * jax.random.normal(
            keys[2], (out_channels, out_channels, 3, 3), jnp.float32),
        "bn2": bn_params(keys[3], out_channels),
        "w3_oihw": 0.1 * jax.random.normal(
            keys[4], (cexp, out_channels, 1, 1), jnp.float32),
        "bn3": bn_params(keys[5], cexp),
        "ws_oihw": None,
        "bns": None,
    }
    if stride != 1 or in_channels != cexp:
        params["ws_oihw"] = 0.1 * jax.random.normal(
            keys[6], (cexp, in_channels, 1, 1), jnp.float32)
        params["bns"] = bn_params(keys[7], cexp)
    return params


def prepare_params(params, eps=1e-5):
    """Fold BN scale into bf16 weights, keep f32 bias, pad channels to 128."""
    cmid, cin = params["w1_oihw"].shape[:2]
    cexp = params["w3_oihw"].shape[0]
    cin_p = _round_up(cin, LANE)
    cmid_p = _round_up(cmid, LANE)
    cexp_p = _round_up(cexp, LANE)

    def fold(bn):
        gamma, beta, mean, var = bn
        scale = gamma / jnp.sqrt(var + eps)
        bias = beta - mean * scale
        return scale, bias

    def pad_bias(bias, cpad):
        # padded columns: weight cols are zero and bias is zero -> exact zeros
        return _pad_axis(bias, 0, cpad).reshape(1, cpad).astype(jnp.float32)

    def w1x1(w_oihw, scale, cinp, coutp):
        m = jnp.transpose(w_oihw[:, :, 0, 0], (1, 0)) * scale[None, :]
        return _pad_axis(_pad_axis(m, 0, cinp), 1, coutp).astype(jnp.bfloat16)

    def w3x3(w_oihw, scale, cinp, coutp):
        m = jnp.transpose(w_oihw, (2, 3, 1, 0)) * scale[None, None, None, :]
        m = _pad_axis(_pad_axis(m, 2, cinp), 3, coutp)
        return m.reshape(9, cinp, coutp).astype(jnp.bfloat16)   # tap-major

    s1, b1 = fold(params["bn1"])
    s2, b2 = fold(params["bn2"])
    s3, b3 = fold(params["bn3"])
    prep = {
        "cin_p": cin_p, "cmid_p": cmid_p, "cexp_p": cexp_p, "cexp": cexp,
        "w1": w1x1(params["w1_oihw"], s1, cin_p, cmid_p), "b1": pad_bias(b1, cmid_p),
        "w2": w3x3(params["w2_oihw"], s2, cmid_p, cmid_p), "b2": pad_bias(b2, cmid_p),
        "w3": w1x1(params["w3_oihw"], s3, cmid_p, cexp_p), "b3": pad_bias(b3, cexp_p),
        "ws": None, "bs": None,
    }
    if params["ws_oihw"] is not None:
        ss, bs = fold(params["bns"])
        prep["ws"] = w1x1(params["ws_oihw"], ss, cin_p, cexp_p)
        prep["bs"] = pad_bias(bs, cexp_p)
    return prep


def bottleneck_forward(x_nhwc, prep, stride):
    n, h, w, _ = x_nhwc.shape
    cin_p, cmid_p, cexp_p = prep["cin_p"], prep["cmid_p"], prep["cexp_p"]

    # Channel-pad + cast to bf16 once; activations stay bf16 end-to-end.
    xp = _pad_axis(x_nhwc, 3, cin_p).astype(jnp.bfloat16)

    # conv1 (1x1) + BN + ReLU
    y1 = fused_matmul(xp.reshape(n * h * w, cin_p), prep["w1"], prep["b1"],
                      relu=True, out_dtype=jnp.bfloat16)
    y1 = y1.reshape(n, h, w, cmid_p)

    # conv2 (3x3, stride, pad=1) + BN + ReLU — 9 taps reduced in-kernel
    y2, (h2, w2) = conv3x3_bn_relu(y1, prep["w2"], prep["b2"], stride)
    m2 = n * h2 * w2
    y2 = y2.reshape(m2, cmid_p)

    # conv3 (1x1 expansion) + BN + shortcut + final ReLU, all in one kernel
    if prep["ws"] is not None:
        xs = xp[:, ::stride, ::stride, :].reshape(m2, cin_p)
        out = fused_matmul(y2, prep["w3"], prep["b3"], relu=True,
                           residual_mm=(xs, prep["ws"], prep["bs"]),
                           out_dtype=jnp.float32)
    else:
        out = fused_matmul(y2, prep["w3"], prep["b3"], relu=True,
                           residual=xp.reshape(m2, cexp_p),
                           out_dtype=jnp.float32)
    return out.reshape(n, h2, w2, cexp_p)[..., :prep["cexp"]]


# ------------------------- pure-JAX reference ------------------------------ #

def _conv_ref(x, w_oihw, stride, padding):
    w_hwio = jnp.transpose(w_oihw, (2, 3, 1, 0))
    return jax.lax.conv_general_dilated(
        x, w_hwio, window_strides=(stride, stride),
        padding=[(padding, padding), (padding, padding)],
        dimension_numbers=("NHWC", "HWIO", "NHWC"))


def _bn_ref(x, bn, eps=1e-5):
    gamma, beta, mean, var = bn
    return (x - mean) / jnp.sqrt(var + eps) * gamma + beta


def bottleneck_ref(x_nhwc, params, stride):
    y = jax.nn.relu(_bn_ref(_conv_ref(x_nhwc, params["w1_oihw"], 1, 0), params["bn1"]))
    y = jax.nn.relu(_bn_ref(_conv_ref(y, params["w2_oihw"], stride, 1), params["bn2"]))
    y = _bn_ref(_conv_ref(y, params["w3_oihw"], 1, 0), params["bn3"])
    if params["ws_oihw"] is not None:
        sc = _bn_ref(_conv_ref(x_nhwc, params["ws_oihw"], stride, 0), params["bns"])
    else:
        sc = x_nhwc
    return jax.nn.relu(y + sc)


# --------------------------------- main ------------------------------------ #

if __name__ == "__main__":
    key = jax.random.PRNGKey(0)

    configs = [
        # (N, Cin, H, W, Cmid, stride): downsample shortcut + strided conv2
        (2, 16, 8, 8, 8, 2),
        # identity shortcut + stride-1 conv2 (Cin == Cmid * expansion)
        (2, 32, 8, 8, 8, 1),
    ]
    for idx, (n, cin, hh, ww, cmid, stride) in enumerate(configs):
        kx, kp, key = jax.random.split(key, 3)
        x_nchw = jax.random.normal(kx, (n, cin, hh, ww), dtype=jnp.float32)
        x_nhwc = jnp.transpose(x_nchw, (0, 2, 3, 1))          # NCHW -> NHWC

        params = init_params(kp, cin, cmid, stride)
        prep = prepare_params(params)

        out = jax.block_until_ready(bottleneck_forward(x_nhwc, prep, stride))
        h2 = (hh - 1) // stride + 1
        w2 = (ww - 1) // stride + 1
        assert out.shape == (n, h2, w2, cmid * EXPANSION), out.shape

        ref = jax.block_until_ready(bottleneck_ref(x_nhwc, params, stride))
        max_err = float(jnp.max(jnp.abs(out - ref)))
        assert jnp.allclose(out, ref, atol=5e-2, rtol=5e-2), (idx, max_err)

    print("KERNEL_OK")
</pallas_src>

<mosaic_0001>
module attributes {stable_mosaic.version = 11 : i64} {
  func.func @_mm_bias_kernel(%arg0: i32, %arg1: memref<128x128xbf16, #tpu.memory_space<vmem>>, %arg2: memref<128x128xbf16, #tpu.memory_space<vmem>>, %arg3: memref<1x128xf32, #tpu.memory_space<vmem>>, %arg4: memref<128x128xbf16, #tpu.memory_space<vmem>>) attributes {dimension_semantics = [#tpu.dimension_semantics<parallel>], iteration_bounds = array<i64: 1>, scalar_prefetch = 0 : i64, scratch_operands = 0 : i64, tpu.core_type = #tpu.core_type<tc>, window_params = [{transform_indices = @transform_0, window_bounds = array<i64: 128, 128>}, {pipeline_mode = #tpu.pipeline_mode<synchronous>, transform_indices = @transform_1, window_bounds = array<i64: 128, 128>}, {pipeline_mode = #tpu.pipeline_mode<synchronous>, transform_indices = @transform_2, window_bounds = array<i64: 1, 128>}, {transform_indices = @transform_3, window_bounds = array<i64: 128, 128>}]} {
    %c0 = arith.constant 0 : index
    %c0_0 = arith.constant 0 : index
    %0 = vector.load %arg1[%c0, %c0_0] : memref<128x128xbf16, #tpu.memory_space<vmem>>, vector<128x128xbf16>
    %c0_1 = arith.constant 0 : index
    %c0_2 = arith.constant 0 : index
    %1 = vector.load %arg2[%c0_1, %c0_2] : memref<128x128xbf16, #tpu.memory_space<vmem>>, vector<128x128xbf16>
    %cst = arith.constant dense<0.000000e+00> : vector<128x128xf32>
    %2 = tpu.matmul %0, %1, %cst {dimension_numbers = #tpu.dot_dimension_numbers<[1], [0], [0], [1], [0, 0, 1, 1], [], []>} : vector<128x128xbf16>, vector<128x128xbf16>, vector<128x128xf32> -> vector<128x128xf32>
    %c0_3 = arith.constant 0 : index
    %c0_4 = arith.constant 0 : index
    %3 = vector.load %arg3[%c0_3, %c0_4] : memref<1x128xf32, #tpu.memory_space<vmem>>, vector<1x128xf32>
    %4 = vector.broadcast %3 : vector<1x128xf32> to vector<128x128xf32>
    %5 = arith.addf %2, %4 : vector<128x128xf32>
    %cst_5 = arith.constant 0.000000e+00 : f32
    %6 = vector.broadcast %cst_5 : f32 to vector<128x128xf32>
    %7 = arith.maximumf %5, %6 : vector<128x128xf32>
    %8 = arith.truncf %7 : vector<128x128xf32> to vector<128x128xbf16>
    %c0_6 = arith.constant 0 : index
    %c0_7 = arith.constant 0 : index
    %9 = vector.load %arg4[%c0_6, %c0_7] : memref<128x128xbf16, #tpu.memory_space<vmem>>, vector<128x128xbf16>
    tpu.vector_store %arg4[%c0_6, %c0_7], %8 {strides = array<i32>} : memref<128x128xbf16, #tpu.memory_space<vmem>>, vector<128x128xbf16>,
    return
  }
  func.func @transform_0(%arg0: i32) -> (i32, i32) {
    %c0_i32 = arith.constant 0 : i32
    %c0_i32_0 = arith.constant 0 : i32
    return %arg0, %c0_i32 : i32, i32
  }
  func.func @transform_1(%arg0: i32) -> (i32, i32) {
    %c0_i32 = arith.constant 0 : i32
    %c0_i32_0 = arith.constant 0 : i32
    %c0_i32_1 = arith.constant 0 : i32
    return %c0_i32, %c0_i32_0 : i32, i32
  }
  func.func @transform_2(%arg0: i32) -> (i32, i32) {
    %c0_i32 = arith.constant 0 : i32
    %c0_i32_0 = arith.constant 0 : i32
    %c0_i32_1 = arith.constant 0 : i32
    return %c0_i32, %c0_i32_0 : i32, i32
  }
  func.func @transform_3(%arg0: i32) -> (i32, i32) {
    %c0_i32 = arith.constant 0 : i32
    %c0_i32_0 = arith.constant 0 : i32
    return %arg0, %c0_i32 : i32, i32
  }
}

</mosaic_0001>

<llo_original>
// kernel: tpu_custom_call.1
$region0: #{tpu_custom_call.1}
  #allocation0 [shape = 'u32[]', space=smem, size = 0x4, offset = 0x4, fixed_abs, tag = 'smem constant byte address 0x4 - core index']
  #allocation1 [shape = 'u32[144,128]{1,0:T(1,128)}', space=vmem, size = 0x12000, scoped, tag = 'internal scratch']
  %s0 = inlined_call_operand.hbm [shape: bf16[128,128], index: 0, kind: input, shape index: {}]
  %s1 = inlined_call_operand.hbm [shape: bf16[128,128], index: 1, kind: input, shape index: {}]
  %s2 = inlined_call_operand.vmem [shape: f32[1,128], index: 2, kind: input, shape index: {}]
  %s3 = inlined_call_operand.hbm [shape: bf16[128,128], index: 3, kind: output, shape index: {}]
  %s4 = sld [smem:[#allocation0]]
  $region30: #{tpu_custom_call.1} parent=0
    _
  %s6 = ssub.s32 1, %s4
  %s7 = scalar_select 0, %s6, %s4
  $region1: #{tpu_custom_call.1} parent=0
    #allocation2 [shape = 'u8[32768]{0}', space=vmem, size = 0x8000, scoped, tag = 'input window, operand 0, single buffered']
    #allocation3 [shape = 's32[1]{0}', space=sflag, size = 0x4, scoped, tag = 'scoped memory for tpu_custom_call.1']
    #allocation4 [shape = 's32[1]{0}', space=sflag, size = 0x4, scoped, tag = 'scoped memory for tpu_custom_call.1']
    #allocation5 [shape = 'u8[32768]{0}', space=vmem, size = 0x8000, scoped, tag = 'input window, operand 1, single buffered']
    #allocation6 [shape = 's32[1]{0}', space=sflag, size = 0x4, scoped, tag = 'scoped memory for tpu_custom_call.1']
    #allocation7 [shape = 'u8[32768]{0}', space=vmem, size = 0x8000, scoped, tag = 'output window, operand 0, single buffered']
    %8 = vsyncpa [#allocation3], 0
    %9 = vsyncpa [#allocation6], 0
    %10 = vsyncpa [#allocation4], 0
    // Predicated region
    $region2: #{tpu_custom_call.1} parent=1 // pred_check
      _
    $region3: #{tpu_custom_call.1} parent=1 // pred_check_branch
      %12 = sbr.rel (0) target = $region5
    $region4: #{tpu_custom_call.1} parent=1 // pred_region
      %s14 = ssub.s32 1024, 1024
      %15 = vsyncadd [#allocation3], %s14
      %s16 = sshll.u32 [#allocation2], 4
      %s17 = int_to_ptr.vmem [resolvable:$true] %s16
      %22 = dma.hbm_to_vmem [thread:$0]  %s0, 1024, %s17, [#allocation3], 64, 64, 4
    $region5: #{tpu_custom_call.1} parent=1 // pred_fallthru
      _
    // Predicated region
    $region6: #{tpu_custom_call.1} parent=1 // pred_check
      _
    $region7: #{tpu_custom_call.1} parent=1 // pred_check_branch
      %24 = sbr.rel (0) target = $region9
    $region8: #{tpu_custom_call.1} parent=1 // pred_region
      %s26 = ssub.s32 1024, 1024
      %27 = vsyncadd [#allocation6], %s26
      %s28 = sshll.u32 [#allocation5], 4
      %s29 = int_to_ptr.vmem [resolvable:$true] %s28
      %34 = dma.hbm_to_vmem [thread:$0]  %s1, 1024, %s29, [#allocation6], 64, 64, 4
    $region9: #{tpu_custom_call.1} parent=1 // pred_fallthru
      _
    // Predicated region
    $region10: #{tpu_custom_call.1} parent=1 // pred_check
      _
    $region11: #{tpu_custom_call.1} parent=1 // pred_check_branch
      %36 = sbr.rel (0) target = $region13
    $region12: #{tpu_custom_call.1} parent=1 // pred_region
      _
    $region13: #{tpu_custom_call.1} parent=1 // pred_fallthru
      _
    // Predicated region
    $region14: #{tpu_custom_call.1} parent=1 // pred_check
      _
    $region15: #{tpu_custom_call.1} parent=1 // pred_check_branch
      %38 = sbr.rel (0) target = $region17
    $region16: #{tpu_custom_call.1} parent=1 // pred_region
      %39 = dma.done [#allocation3], 1024
    $region17: #{tpu_custom_call.1} parent=1 // pred_fallthru
      _
    // Predicated region
    $region18: #{tpu_custom_call.1} parent=1 // pred_check
      _
    $region19: #{tpu_custom_call.1} parent=1 // pred_check_branch
      %41 = sbr.rel (0) target = $region21
    $region20: #{tpu_custom_call.1} parent=1 // pred_region
      %42 = dma.done [#allocation6], 1024
    $region21: #{tpu_custom_call.1} parent=1 // pred_fallthru
      _
    %v44 = vld [vmem:[#allocation2] sm:$0xf]
    %v45 = vld [vmem:[#allocation2 + $0x4] sm:$0xf]
    %v46 = vld [vmem:[#allocation2 + $0x8] sm:$0xf]
    %v47 = vld [vmem:[#allocation2 + $0xc] sm:$0xf]
    %v48 = vld [vmem:[#allocation2 + $0x10] sm:$0xf]
    %v49 = vld [vmem:[#allocation2 + $0x14] sm:$0xf]
    %v50 = vld [vmem:[#allocation2 + $0x18] sm:$0xf]
    %v51 = vld [vmem:[#allocation2 + $0x1c] sm:$0xf]
    %v52 = vld [vmem:[#allocation2 + $0x20] sm:$0xf]
    %v53 = vld [vmem:[#allocation2 + $0x24] sm:$0xf]
    %v54 = vld [vmem:[#allocation2 + $0x28] sm:$0xf]
    %v55 = vld [vmem:[#allocation2 + $0x2c] sm:$0xf]
    %v56 = vld [vmem:[#allocation2 + $0x30] sm:$0xf]
    %v57 = vld [vmem:[#allocation2 + $0x34] sm:$0xf]
    %v58 = vld [vmem:[#allocation2 + $0x38] sm:$0xf]
    %v59 = vld [vmem:[#allocation2 + $0x3c] sm:$0xf]
    %v60 = vld [vmem:[#allocation5] sm:$0xf]
    %v61 = vld [vmem:[#allocation5 + $0x4] sm:$0xf]
    %v62 = vld [vmem:[#allocation5 + $0x8] sm:$0xf]
    %v63 = vld [vmem:[#allocation5 + $0xc] sm:$0xf]
    %v64 = vld [vmem:[#allocation5 + $0x10] sm:$0xf]
    %v65 = vld [vmem:[#allocation5 + $0x14] sm:$0xf]
    %v66 = vld [vmem:[#allocation5 + $0x18] sm:$0xf]
    %v67 = vld [vmem:[#allocation5 + $0x1c] sm:$0xf]
    %v68 = vld [vmem:[#allocation5 + $0x20] sm:$0xf]
    %v69 = vld [vmem:[#allocation5 + $0x24] sm:$0xf]
    %v70 = vld [vmem:[#allocation5 + $0x28] sm:$0xf]
    %v71 = vld [vmem:[#allocation5 + $0x2c] sm:$0xf]
    %v72 = vld [vmem:[#allocation5 + $0x30] sm:$0xf]
    %v73 = vld [vmem:[#allocation5 + $0x34] sm:$0xf]
    %v74 = vld [vmem:[#allocation5 + $0x38] sm:$0xf]
    %v75 = vld [vmem:[#allocation5 + $0x3c] sm:$0xf]
    %v76 = vld [vmem:[%s2] sm:$0x1]
    %v78 = vlaneseq
    %v79 = vshrl.u32 %v78, 7
    %v80 = vsub.s32 0, %v79
    %v81 = vrot.slane %v76, %v80
    %v99 = vunpack.c.l.b16 %v44
    %v100 = vunpack.c.l.b16 %v45
    %v101 = vunpack.c.l.b16 %v46
    %v102 = vunpack.c.l.b16 %v47
    %v103 = vunpack.c.l.b16 %v48
    %v104 = vunpack.c.l.b16 %v49
    %v105 = vunpack.c.l.b16 %v50
    %v106 = vunpack.c.l.b16 %v51
    %v107 = vunpack.c.l.b16 %v52
    %v108 = vunpack.c.l.b16 %v53
    %v109 = vunpack.c.l.b16 %v54
    %v110 = vunpack.c.l.b16 %v55
    %v111 = vunpack.c.l.b16 %v56
    %v112 = vunpack.c.l.b16 %v57
    %v113 = vunpack.c.l.b16 %v58
    %v114 = vunpack.c.l.b16 %v59
    %v115 = vpack.c.b16 %v100, %v99
    %v116 = vpack.c.b16 %v102, %v101
    %v117 = vpack.c.b16 %v104, %v103
    %v118 = vpack.c.b16 %v106, %v105
    %v119 = vpack.c.b16 %v108, %v107
    %v120 = vpack.c.b16 %v110, %v109
    %v121 = vpack.c.b16 %v112, %v111
    %v122 = vpack.c.b16 %v114, %v113
    %v147 = vunpack.c.l.b16 %v60
    %v148 = vunpack.c.l.b16 %v61
    %v149 = vunpack.c.l.b16 %v62
    %v150 = vunpack.c.l.b16 %v63
    %v151 = vunpack.c.l.b16 %v64
    %v152 = vunpack.c.l.b16 %v65
    %v153 = vunpack.c.l.b16 %v66
    %v154 = vunpack.c.l.b16 %v67
    %v155 = vunpack.c.l.b16 %v68
    %v156 = vunpack.c.l.b16 %v69
    %v157 = vunpack.c.l.b16 %v70
    %v158 = vunpack.c.l.b16 %v71
    %v159 = vunpack.c.l.b16 %v72
    %v160 = vunpack.c.l.b16 %v73
    %v161 = vunpack.c.l.b16 %v74
    %v162 = vunpack.c.l.b16 %v75
    %v163 = vpack.c.b16 %v148, %v147
    %v164 = vpack.c.b16 %v150, %v149
    %v165 = vpack.c.b16 %v152, %v151
    %v166 = vpack.c.b16 %v154, %v153
    %v167 = vpack.c.b16 %v156, %v155
    %v168 = vpack.c.b16 %v158, %v157
    %v169 = vpack.c.b16 %v160, %v159
    %v170 = vpack.c.b16 %v162, %v161
    %179 = vmatprep.subr.bf16.mxu0 0
    %180 = vmatpush1.bf16.msra.mxu0 %v163
    %181 = vmatprep.subr.bf16.mxu0 0
    %182 = vmatpush1.bf16.msra.mxu0 %v164
    %183 = vmatprep.subr.bf16.mxu0 0
    %184 = vmatpush1.bf16.msra.mxu0 %v165
    %185 = vmatprep.subr.bf16.mxu0 0
    %186 = vmatpush1.bf16.msra.mxu0 %v166
    %187 = vmatprep.subr.bf16.mxu0 0
    %188 = vmatpush1.bf16.msra.mxu0 %v167
    %189 = vmatprep.subr.bf16.mxu0 0
    %190 = vmatpush1.bf16.msra.mxu0 %v168
    %191 = vmatprep.subr.bf16.mxu0 0
    %192 = vmatpush1.bf16.msra.mxu0 %v169
    %193 = vmatprep.subr.bf16.mxu0 0
    %194 = vmatpush1.bf16.msra.mxu0 %v170
    %195 = vmatprep.subr.bf16.mxu0 0
    %196 = vmatpush1.bf16.msra.mxu0 0
    %197 = vmatprep.subr.bf16.mxu0 0
    %198 = vmatpush1.bf16.msra.mxu0 0
    %199 = vmatprep.subr.bf16.mxu0 0
    %200 = vmatpush1.bf16.msra.mxu0 0
    %201 = vmatprep.subr.bf16.mxu0 0
    %202 = vmatpush1.bf16.msra.mxu0 0
    %203 = vmatprep.subr.bf16.mxu0 0
    %204 = vmatpush1.bf16.msra.mxu0 0
    %205 = vmatprep.subr.bf16.mxu0 0
    %206 = vmatpush1.bf16.msra.mxu0 0
    %207 = vmatprep.subr.bf16.mxu0 0
    %208 = vmatpush1.bf16.msra.mxu0 0
    %209 = vmatprep.subr.bf16.mxu0 0
    %210 = vmatpush1.bf16.msra.mxu0 0
    %211 = vmatprep.mubr.bf16.mxu0 0
    %212 = vmatmul.mubr.bf16.gmra.mrb[0].mxu0 %v115
    %v213 = vpop.f32.mrb[0].mxu0
    %v214 = vadd.f32 %v81, %v213
    %v215 = vpop.f32.mrb[0].mxu0
    %v216 = vpop.f32.mrb[0].mxu0
    %v217 = vadd.f32 %v81, %v216
    %v218 = vpop.f32.mrb[0].mxu0
    %219 = vmatprep.mubr.bf16.mxu0 0
    %220 = vmatmul.mubr.bf16.gmra.mrb[0].mxu0 %v116
    %v221 = vpop.f32.mrb[0].mxu0
    %v222 = vadd.f32 %v81, %v221
    %v223 = vpop.f32.mrb[0].mxu0
    %v224 = vpop.f32.mrb[0].mxu0
    %v225 = vadd.f32 %v81, %v224
    %v226 = vpop.f32.mrb[0].mxu0
    %227 = vmatprep.mubr.bf16.mxu0 0
    %228 = vmatmul.mubr.bf16.gmra.mrb[0].mxu0 %v117
    %v229 = vpop.f32.mrb[0].mxu0
    %v230 = vadd.f32 %v81, %v229
    %v231 = vpop.f32.mrb[0].mxu0
    %v232 = vpop.f32.mrb[0].mxu0
    %v233 = vadd.f32 %v81, %v232
    %v234 = vpop.f32.mrb[0].mxu0
    %235 = vmatprep.mubr.bf16.mxu0 0
    %236 = vmatmul.mubr.bf16.gmra.mrb[0].mxu0 %v118
    %v237 = vpop.f32.mrb[0].mxu0
    %v238 = vadd.f32 %v81, %v237
    %v239 = vpop.f32.mrb[0].mxu0
    %v240 = vpop.f32.mrb[0].mxu0
    %v241 = vadd.f32 %v81, %v240
    %v242 = vpop.f32.mrb[0].mxu0
    %243 = vmatprep.mubr.bf16.mxu0 0
    %244 = vmatmul.mubr.bf16.gmra.mrb[0].mxu0 %v119
    %v245 = vpop.f32.mrb[0].mxu0
    %v246 = vadd.f32 %v81, %v245
    %v247 = vpop.f32.mrb[0].mxu0
    %v248 = vpop.f32.mrb[0].mxu0
    %v249 = vadd.f32 %v81, %v248
    %v250 = vpop.f32.mrb[0].mxu0
    %251 = vmatprep.mubr.bf16.mxu0 0
    %252 = vmatmul.mubr.bf16.gmra.mrb[0].mxu0 %v120
    %v253 = vpop.f32.mrb[0].mxu0
    %v254 = vadd.f32 %v81, %v253
    %v255 = vpop.f32.mrb[0].mxu0
    %v256 = vpop.f32.mrb[0].mxu0
    %v257 = vadd.f32 %v81, %v256
    %v258 = vpop.f32.mrb[0].mxu0
    %259 = vmatprep.mubr.bf16.mxu0 0
    %260 = vmatmul.mubr.bf16.gmra.mrb[0].mxu0 %v121
    %v261 = vpop.f32.mrb[0].mxu0
    %v262 = vadd.f32 %v81, %v261
    %v263 = vpop.f32.mrb[0].mxu0
    %v264 = vpop.f32.mrb[0].mxu0
    %v265 = vadd.f32 %v81, %v264
    %v266 = vpop.f32.mrb[0].mxu0
    %267 = vmatprep.mubr.bf16.mxu0 0
    %268 = vmatmul.mubr.bf16.gmra.mrb[0].mxu0 %v122
    %v269 = vpop.f32.mrb[0].mxu0
    %v270 = vadd.f32 %v81, %v269
    %v271 = vpop.f32.mrb[0].mxu0
    %v272 = vpop.f32.mrb[0].mxu0
    %v273 = vadd.f32 %v81, %v272
    %v274 = vpop.f32.mrb[0].mxu0
    %275 = vdwg.mxu0
    %v276 = vmax.f32 %v214, 0.0
    %v277 = vmax.f32 %v217, 0.0
    %v278 = vmax.f32 %v222, 0.0
    %v279 = vmax.f32 %v225, 0.0
    %v280 = vmax.f32 %v230, 0.0
    %v281 = vmax.f32 %v233, 0.0
    %v282 = vmax.f32 %v238, 0.0
    %v283 = vmax.f32 %v241, 0.0
    %v284 = vmax.f32 %v246, 0.0
    %v285 = vmax.f32 %v249, 0.0
    %v286 = vmax.f32 %v254, 0.0
    %v287 = vmax.f32 %v257, 0.0
    %v288 = vmax.f32 %v262, 0.0
    %v289 = vmax.f32 %v265, 0.0
    %v290 = vmax.f32 %v270, 0.0
    %v291 = vmax.f32 %v273, 0.0
    %v292 = vpack.c.bf16 %v277, %v276
    %v293 = vpack.c.bf16 %v279, %v278
    %v294 = vpack.c.bf16 %v281, %v280
    %v295 = vpack.c.bf16 %v283, %v282
    %v296 = vpack.c.bf16 %v285, %v284
    %v297 = vpack.c.bf16 %v287, %v286
    %v298 = vpack.c.bf16 %v289, %v288
    %v299 = vpack.c.bf16 %v291, %v290
    %v308 = vunpack.c.l.b16 %v292
    %v309 = vunpack.c.h.b16 %v292
    %v310 = vunpack.c.l.b16 %v293
    %v311 = vunpack.c.h.b16 %v293
    %v312 = vunpack.c.l.b16 %v294
    %v313 = vunpack.c.h.b16 %v294
    %v314 = vunpack.c.l.b16 %v295
    %v315 = vunpack.c.h.b16 %v295
    %v316 = vunpack.c.l.b16 %v296
    %v317 = vunpack.c.h.b16 %v296
    %v318 = vunpack.c.l.b16 %v297
    %v319 = vunpack.c.h.b16 %v297
    %v320 = vunpack.c.l.b16 %v298
    %v321 = vunpack.c.h.b16 %v298
    %v322 = vunpack.c.l.b16 %v299
    %v323 = vunpack.c.h.b16 %v299
    %v324 = vpack.c.b16 %v308, %v308
    %v325 = vpack.c.b16 %v309, %v309
    %v326 = vpack.c.b16 %v310, %v310
    %v327 = vpack.c.b16 %v311, %v311
    %v328 = vpack.c.b16 %v312, %v312
    %v329 = vpack.c.b16 %v313, %v313
    %v330 = vpack.c.b16 %v314, %v314
    %v331 = vpack.c.b16 %v315, %v315
    %v332 = vpack.c.b16 %v316, %v316
    %v333 = vpack.c.b16 %v317, %v317
    %v334 = vpack.c.b16 %v318, %v318
    %v335 = vpack.c.b16 %v319, %v319
    %v336 = vpack.c.b16 %v320, %v320
    %v337 = vpack.c.b16 %v321, %v321
    %v338 = vpack.c.b16 %v322, %v322
    %v339 = vpack.c.b16 %v323, %v323
    %356 = vst [vmem:[#allocation7] sm:$0xf] %v324
    %357 = vst [vmem:[#allocation7 + $0x4] sm:$0xf] %v325
    %358 = vst [vmem:[#allocation7 + $0x8] sm:$0xf] %v326
    %359 = vst [vmem:[#allocation7 + $0xc] sm:$0xf] %v327
    %360 = vst [vmem:[#allocation7 + $0x10] sm:$0xf] %v328
    %361 = vst [vmem:[#allocation7 + $0x14] sm:$0xf] %v329
    %362 = vst [vmem:[#allocation7 + $0x18] sm:$0xf] %v330
    %363 = vst [vmem:[#allocation7 + $0x1c] sm:$0xf] %v331
    %364 = vst [vmem:[#allocation7 + $0x20] sm:$0xf] %v332
    %365 = vst [vmem:[#allocation7 + $0x24] sm:$0xf] %v333
    %366 = vst [vmem:[#allocation7 + $0x28] sm:$0xf] %v334
    %367 = vst [vmem:[#allocation7 + $0x2c] sm:$0xf] %v335
    %368 = vst [vmem:[#allocation7 + $0x30] sm:$0xf] %v336
    %369 = vst [vmem:[#allocation7 + $0x34] sm:$0xf] %v337
    %370 = vst [vmem:[#allocation7 + $0x38] sm:$0xf] %v338
    %371 = vst [vmem:[#allocation7 + $0x3c] sm:$0xf] %v339
    // Predicated region
    $region22: #{tpu_custom_call.1} parent=1 // pred_check
      _
    $region23: #{tpu_custom_call.1} parent=1 // pred_check_branch
      %373 = sbr.rel (0) target = $region25
    $region24: #{tpu_custom_call.1} parent=1 // pred_region
      %s375 = ssub.s32 1024, 1024
      %376 = vsyncadd [#allocation4], %s375
      %s377 = sshll.u32 [#allocation7], 4
      %s378 = int_to_ptr.vmem [resolvable:$true] %s377
      %383 = dma.vmem_to_hbm [thread:$0]  %s378, 1024, %s3, [#allocation4], 64, 64, 4
    $region25: #{tpu_custom_call.1} parent=1 // pred_fallthru
      _
    // Predicated region
    $region26: #{tpu_custom_call.1} parent=1 // pred_check
      _
    $region27: #{tpu_custom_call.1} parent=1 // pred_check_branch
      %385 = sbr.rel (0) target = $region29
    $region28: #{tpu_custom_call.1} parent=1 // pred_region
      %386 = dma.done [#allocation4], 1024
    $region29: #{tpu_custom_call.1} parent=1 // pred_fallthru
      _
    %387 = vsyncpa [#allocation3], 1
    %388 = vsyncpa [#allocation6], 1
    %389 = vsyncpa [#allocation4], 1

</llo_original>
